<compile_context>
chip_gen: v7x
topology: tpu7x:2x2x1
jax: 0.10.0
libtpu: 0.0.40
codegen_flags: <defaults>
</compile_context>

<pallas_src>
import numpy as np
import jax
import jax.numpy as jnp
from jax.experimental import pallas as pl
from jax.experimental.pallas import tpu as pltpu

EPS = 1e-12                   # L2Pool2d.EPS
_KRON_MAX_HW = 1024           # planes up to 32x32 use the single-GEMM path
_HIGHEST = jax.lax.Precision.HIGHEST


# ----------------------------- weights -------------------------------------

def _hann_window_1d(kernel_size: int) -> np.ndarray:
    # torch.hann_window(kernel_size + 2, periodic=False)[1:-1]
    m = np.arange(1, kernel_size + 1, dtype=np.float64)
    return 0.5 * (1.0 - np.cos(2.0 * np.pi * m / (kernel_size + 1)))


def _fold_matrices(H, W, Ho, Wo, kernel_size, stride, padding):
    """1-D pooling matrices with the zero padding folded in (float64)."""
    win = _hann_window_1d(kernel_size)
    wn = win / win.sum()
    A = np.zeros((Ho, H), np.float64)
    for ho in range(Ho):
        for i in range(kernel_size):
            h = stride * ho + i - padding
            if 0 <= h < H:
                A[ho, h] = wn[i]
    B = np.zeros((W, Wo), np.float64)
    for wo in range(Wo):
        for j in range(kernel_size):
            w = stride * wo + j - padding
            if 0 <= w < W:
                B[w, wo] = wn[j]
    return A, B, wn


# -------------------------- VMEM / chunk sizing -----------------------------

def _round_up(v, m):
    return ((v + m - 1) // m) * m


def _padded_plane(rows, cols, itemsize):
    """Bytes of a 2-D VMEM tile after (8, 128) sublane/lane padding."""
    return _round_up(max(rows, 1), 8) * _round_up(max(cols, 1), 128) * itemsize


def _vmem_budget_bytes():
    """(vmem_limit_bytes, block budget) sized per TPU generation."""
    cap = 64 * 1024 * 1024               # conservative fallback = v7x physical/TC
    try:
        info = pltpu.get_tpu_info()
        cap_attr = getattr(info, "vmem_capacity_bytes", None)
        if cap_attr:
            cap = int(cap_attr)
    except Exception:
        pass
    vmem_limit = (cap * 3) // 4          # ~0.75x physical (96 MiB v5e/v6e, 48 MiB v7x)
    block_budget = vmem_limit // 2       # headroom for compiler scratch / semaphores
    return vmem_limit, block_budget


def _kron_channel_chunk(HW, OW, in_bytes, budget):
    # Per-channel rows are lane-padded; the TC (sublane) dim is kept 8-aligned.
    fixed = 2 * _padded_plane(HW, OW, 4)                 # folded kernel matrix (x2 bufs)
    per_chan = (2 * in_bytes * _round_up(HW, 128)        # input block, double-buffered
                + 2 * 4 * _round_up(HW, 128)             # f32 cast + square temporaries
                + 4 * _round_up(OW, 128)                 # f32 GEMM result
                + 2 * in_bytes * _round_up(OW, 128))     # output block, double-buffered
    return max(1, (budget - fixed) // per_chan)


def _sep_channel_chunk(H2, W, Ho, Wo, in_bytes, budget):
    fixed = 2 * _padded_plane(W, Wo, 4)                  # width matrix B (x2 bufs)
    per_chan = (2 * in_bytes * _padded_plane(H2, 2 * W, 1)   # input block, double-buffered
                + 2 * 4 * _padded_plane(H2, 2 * W, 1)        # f32 square + even/odd slices
                + 4 * _padded_plane(Ho, W, 1)                # height-tap scratch
                + 4 * _padded_plane(Ho, Wo, 1)               # f32 GEMM result
                + 2 * in_bytes * _padded_plane(Ho, Wo, 1))   # output block, double-buffered
    return max(1, (budget - fixed) // per_chan)


def _choose_chunk(M, tc_max):
    """Largest 8-aligned channel chunk that fits, with an (best-effort) even
    number of grid blocks so both v7x TensorCores stay busy."""
    tc_max = max(1, min(int(tc_max), 1024))
    nblk = pl.cdiv(M, tc_max)
    if M >= 16:                          # enough rows to be worth splitting across 2 TCs
        nblk = max(nblk, 2)
        if nblk % 2:
            nblk += 1
    tc = pl.cdiv(M, nblk)
    if tc < M:
        tc = min(M, _round_up(tc, 8))    # keep the block's sublane dim 8-aligned
    return tc


# ------------------------------- kernels ------------------------------------

def _l2pool_kron_kernel(x_ref, k_ref, o_ref):
    # x_ref: (TC, H*W) lane-dense channel rows
    # k_ref: (H*W, Ho*Wo) folded Kronecker pooling matrix (A (x) B)
    # o_ref: (TC, Ho*Wo) lane-dense output rows
    x = x_ref[...].astype(jnp.float32)
    o = jnp.dot(x * x, k_ref[...],
                preferred_element_type=jnp.float32, precision=_HIGHEST)
    o_ref[...] = jnp.sqrt(o + EPS).astype(o_ref.dtype)


def _make_sep_kernel(taps, W, Ho):
    # taps: static tuple of (weight, parity, ho_lo, ho_hi, row_shift)
    def kernel(x_ref, b_ref, o_ref, u_ref):
        # x_ref: (TC, H//2, 2W)  even input rows in lanes [0,W), odd in [W,2W)
        # b_ref: (W, Wo)  width weight matrix (padding folded in)
        # o_ref: (TC, Ho, Wo)
        # u_ref: (TC, Ho, W) f32 scratch (height-contracted squares)
        x = x_ref[...].astype(jnp.float32)
        xsq = x * x
        xe = xsq[:, :, :W]          # x[2k]   ** 2
        xo = xsq[:, :, W:]          # x[2k+1] ** 2
        u_ref[...] = jnp.zeros_like(u_ref)
        for w_i, parity, lo, hi, r0 in taps:        # VPU: 3 shifted FMAs, no MXU
            src = xe if parity == 0 else xo
            u_ref[:, lo:hi, :] += w_i * src[:, lo + r0:hi + r0, :]
        # Width contraction: one tall GEMM (contract last dim with first of B).
        t = jax.lax.dot_general(u_ref[...], b_ref[...],
                                dimension_numbers=(((2,), (0,)), ((), ())),
                                preferred_element_type=jnp.float32,
                                precision=_HIGHEST)
        o_ref[...] = jnp.sqrt(t + EPS).astype(o_ref.dtype)
    return kernel


# ------------------------------- wrapper ------------------------------------

def l2pool2d(x, kernel_size: int = 3, stride: int = 2, padding: int = 1):
    N, C, H, W = x.shape
    Ho = (H + 2 * padding - kernel_size) // stride + 1
    Wo = (W + 2 * padding - kernel_size) // stride + 1
    M = N * C
    in_bytes = jnp.dtype(x.dtype).itemsize

    A, B, wn = _fold_matrices(H, W, Ho, Wo, kernel_size, stride, padding)
    vmem_limit, budget = _vmem_budget_bytes()
    compiler_params = pltpu.CompilerParams(
        dimension_semantics=("parallel",), vmem_limit_bytes=vmem_limit)

    separable_ok = (stride == 2) and (H % 2 == 0)

    if (H * W <= _KRON_MAX_HW) or not separable_ok:
        # ----- single-GEMM (Kronecker) path: lane-dense input and output -----
        HW, OW = H * W, Ho * Wo
        Kmat = np.einsum("oh,wq->hwoq", A, B).reshape(HW, OW).astype(np.float32)
        TC = _choose_chunk(M, _kron_channel_chunk(HW, OW, in_bytes, budget))
        out = pl.pallas_call(
            _l2pool_kron_kernel,
            out_shape=jax.ShapeDtypeStruct((M, OW), x.dtype),
            grid=(pl.cdiv(M, TC),),
            in_specs=[pl.BlockSpec((TC, HW), lambda i: (i, 0)),
                      pl.BlockSpec((HW, OW), lambda i: (0, 0))],
            out_specs=pl.BlockSpec((TC, OW), lambda i: (i, 0)),
            compiler_params=compiler_params,
        )(x.reshape(M, HW), jnp.asarray(Kmat))
        return out.reshape(N, C, Ho, Wo)

    # ----- separable path (large planes): VPU height taps + one width GEMM ---
    H2 = H // 2
    taps = []
    for i in range(kernel_size):
        d = i - padding                       # input row h = 2*ho + d
        parity = d % 2                        # 0 -> even rows, 1 -> odd rows
        r0 = (d - parity) // 2                # row shift within the even/odd half
        lo = max(0, -r0)
        hi = min(Ho, H2 - r0)
        if hi > lo:
            taps.append((float(wn[i]), parity, lo, hi, r0))
    TC = _choose_chunk(M, _sep_channel_chunk(H2, W, Ho, Wo, in_bytes, budget))
    out = pl.pallas_call(
        _make_sep_kernel(tuple(taps), W, Ho),
        out_shape=jax.ShapeDtypeStruct((M, Ho, Wo), x.dtype),
        grid=(pl.cdiv(M, TC),),
        in_specs=[pl.BlockSpec((TC, H2, 2 * W), lambda i: (i, 0, 0)),
                  pl.BlockSpec((W, Wo), lambda i: (0, 0))],
        out_specs=pl.BlockSpec((TC, Ho, Wo), lambda i: (i, 0, 0)),
        scratch_shapes=[pltpu.VMEM((TC, Ho, W), jnp.float32)],
        compiler_params=compiler_params,
    )(x.reshape(M, H2, 2 * W), jnp.asarray(B.astype(np.float32)))
    return out.reshape(N, C, Ho, Wo)


# ------------------------------- reference ----------------------------------

def l2pool2d_ref(x, kernel_size: int = 3, stride: int = 2, padding: int = 1):
    # Pure-JAX reference matching torch.nn.functional.conv2d(groups=C) semantics.
    C = x.shape[1]
    win = _hann_window_1d(kernel_size)
    k2 = np.outer(win, win)
    k2 = (k2 / k2.sum()).astype(np.float32)
    k = jnp.asarray(np.tile(k2[None, None], (C, 1, 1, 1)))
    xf = x.astype(jnp.float32)
    out = jax.lax.conv_general_dilated(
        xf * xf, k,
        window_strides=(stride, stride),
        padding=((padding, padding), (padding, padding)),
        dimension_numbers=("NCHW", "OIHW", "NCHW"),
        feature_group_count=C,
        precision=_HIGHEST)
    return jnp.sqrt(out + EPS).astype(x.dtype)


if __name__ == "__main__":
    # Small plane -> Kronecker (single-GEMM, lane-dense in/out) path.
    x1 = jax.random.normal(jax.random.PRNGKey(0), (2, 4, 16, 16), dtype=jnp.float32)
    o1 = jax.block_until_ready(l2pool2d(x1))
    r1 = jax.block_until_ready(l2pool2d_ref(x1))
    assert o1.shape == (2, 4, 8, 8), o1.shape
    np.testing.assert_allclose(np.asarray(o1), np.asarray(r1), rtol=1e-5, atol=1e-6)

    # Larger plane -> separable (VPU height taps + one width GEMM) path.
    x2 = jax.random.normal(jax.random.PRNGKey(1), (2, 4, 48, 48), dtype=jnp.float32)
    o2 = jax.block_until_ready(l2pool2d(x2))
    r2 = jax.block_until_ready(l2pool2d_ref(x2))
    assert o2.shape == (2, 4, 24, 24), o2.shape
    np.testing.assert_allclose(np.asarray(o2), np.asarray(r2), rtol=1e-5, atol=1e-6)

    print("KERNEL_OK")
</pallas_src>

<mosaic_0001>
module attributes {stable_mosaic.version = 11 : i64} {
  func.func @_l2pool_kron_kernel(%arg0: i32, %arg1: memref<8x256xf32, #tpu.memory_space<vmem>>, %arg2: memref<256x64xf32, #tpu.memory_space<vmem>>, %arg3: memref<8x64xf32, #tpu.memory_space<vmem>>) attributes {dimension_semantics = [#tpu.dimension_semantics<parallel>], iteration_bounds = array<i64: 1>, scalar_prefetch = 0 : i64, scratch_operands = 0 : i64, tpu.core_type = #tpu.core_type<tc>, window_params = [{transform_indices = @transform_0, window_bounds = array<i64: 8, 256>}, {pipeline_mode = #tpu.pipeline_mode<synchronous>, transform_indices = @transform_1, window_bounds = array<i64: 256, 64>}, {transform_indices = @transform_2, window_bounds = array<i64: 8, 64>}]} {
    %c0 = arith.constant 0 : index
    %c0_0 = arith.constant 0 : index
    %0 = vector.load %arg1[%c0, %c0_0] : memref<8x256xf32, #tpu.memory_space<vmem>>, vector<8x256xf32>
    %1 = arith.mulf %0, %0 : vector<8x256xf32>
    %c0_1 = arith.constant 0 : index
    %c0_2 = arith.constant 0 : index
    %2 = vector.load %arg2[%c0_1, %c0_2] : memref<256x64xf32, #tpu.memory_space<vmem>>, vector<256x64xf32>
    %cst = arith.constant dense<0.000000e+00> : vector<8x64xf32>
    %3 = tpu.matmul %1, %2, %cst {dimension_numbers = #tpu.dot_dimension_numbers<[1], [0], [0], [1], [0, 0, 1, 1], [], []>, precision = #tpu.contract_precision<fp32>} : vector<8x256xf32>, vector<256x64xf32>, vector<8x64xf32> -> vector<8x64xf32>
    %cst_3 = arith.constant 9.99999996E-13 : f32
    %4 = vector.broadcast %cst_3 : f32 to vector<8x64xf32>
    %5 = arith.addf %3, %4 : vector<8x64xf32>
    %6 = math.sqrt %5 : vector<8x64xf32>
    %c0_4 = arith.constant 0 : index
    %c0_5 = arith.constant 0 : index
    %7 = vector.load %arg3[%c0_4, %c0_5] : memref<8x64xf32, #tpu.memory_space<vmem>>, vector<8x64xf32>
    tpu.vector_store %arg3[%c0_4, %c0_5], %6 {strides = array<i32>} : memref<8x64xf32, #tpu.memory_space<vmem>>, vector<8x64xf32>,
    return
  }
  func.func @transform_0(%arg0: i32) -> (i32, i32) {
    %c0_i32 = arith.constant 0 : i32
    %c0_i32_0 = arith.constant 0 : i32
    return %arg0, %c0_i32 : i32, i32
  }
  func.func @transform_1(%arg0: i32) -> (i32, i32) {
    %c0_i32 = arith.constant 0 : i32
    %c0_i32_0 = arith.constant 0 : i32
    %c0_i32_1 = arith.constant 0 : i32
    return %c0_i32, %c0_i32_0 : i32, i32
  }
  func.func @transform_2(%arg0: i32) -> (i32, i32) {
    %c0_i32 = arith.constant 0 : i32
    %c0_i32_0 = arith.constant 0 : i32
    return %arg0, %c0_i32 : i32, i32
  }
}

</mosaic_0001>

<llo_original>
// kernel: tpu_custom_call.1
$region0: #{tpu_custom_call.1}
  #allocation0 [shape = 'u32[]', space=smem, size = 0x4, offset = 0x4, fixed_abs, tag = 'smem constant byte address 0x4 - core index']
  #allocation1 [shape = 'u32[144,128]{1,0:T(1,128)}', space=vmem, size = 0x12000, scoped, tag = 'internal scratch']
  %s0 = inlined_call_operand.vmem [shape: f32[8,256], index: 0, kind: input, shape index: {}]
  %s1 = inlined_call_operand.vmem [shape: f32[256,64], index: 1, kind: input, shape index: {}]
  %s2 = inlined_call_operand.hbm [shape: f32[8,64], index: 2, kind: output, shape index: {}]
  %s3 = sld [smem:[#allocation0]]
  $region18: #{tpu_custom_call.1} parent=0
    _
  %s5 = ssub.s32 1, %s3
  %s6 = scalar_select 0, %s5, %s3
  $region1: #{tpu_custom_call.1} parent=0
    #allocation2 [shape = 'u8[4096]{0}', space=vmem, size = 0x1000, scoped, tag = 'output window, operand 0, single buffered']
    #allocation3 [shape = 's32[1]{0}', space=sflag, size = 0x4, scoped, tag = 'scoped memory for tpu_custom_call.1']
    %7 = vsyncpa [#allocation3], 0
    // Predicated region
    $region2: #{tpu_custom_call.1} parent=1 // pred_check
      _
    $region3: #{tpu_custom_call.1} parent=1 // pred_check_branch
      %9 = sbr.rel (0) target = $region5
    $region4: #{tpu_custom_call.1} parent=1 // pred_region
      _
    $region5: #{tpu_custom_call.1} parent=1 // pred_fallthru
      _
    // Predicated region
    $region6: #{tpu_custom_call.1} parent=1 // pred_check
      _
    $region7: #{tpu_custom_call.1} parent=1 // pred_check_branch
      %11 = sbr.rel (0) target = $region9
    $region8: #{tpu_custom_call.1} parent=1 // pred_region
      _
    $region9: #{tpu_custom_call.1} parent=1 // pred_fallthru
      _
    %v12 = vld [vmem:[%s0] sm:$0xff]
    %v13 = vld [vmem:[%s0 + $0x8] sm:$0xff]
    %v14 = vmul.f32 %v12, %v12
    %v15 = vmul.f32 %v13, %v13
    %v16 = vld [vmem:[%s1] sm:$0xff]
    %v17 = vld [vmem:[%s1 + $0x8] sm:$0xff]
    %v18 = vld [vmem:[%s1 + $0x10] sm:$0xff]
    %v19 = vld [vmem:[%s1 + $0x18] sm:$0xff]
    %v20 = vld [vmem:[%s1 + $0x20] sm:$0xff]
    %v21 = vld [vmem:[%s1 + $0x28] sm:$0xff]
    %v22 = vld [vmem:[%s1 + $0x30] sm:$0xff]
    %v23 = vld [vmem:[%s1 + $0x38] sm:$0xff]
    %v24 = vld [vmem:[%s1 + $0x40] sm:$0xff]
    %v25 = vld [vmem:[%s1 + $0x48] sm:$0xff]
    %v26 = vld [vmem:[%s1 + $0x50] sm:$0xff]
    %v27 = vld [vmem:[%s1 + $0x58] sm:$0xff]
    %v28 = vld [vmem:[%s1 + $0x60] sm:$0xff]
    %v29 = vld [vmem:[%s1 + $0x68] sm:$0xff]
    %v30 = vld [vmem:[%s1 + $0x70] sm:$0xff]
    %v31 = vld [vmem:[%s1 + $0x78] sm:$0xff]
    %v32 = vld [vmem:[%s1 + $0x80] sm:$0xff]
    %v33 = vld [vmem:[%s1 + $0x88] sm:$0xff]
    %v34 = vld [vmem:[%s1 + $0x90] sm:$0xff]
    %v35 = vld [vmem:[%s1 + $0x98] sm:$0xff]
    %v36 = vld [vmem:[%s1 + $0xa0] sm:$0xff]
    %v37 = vld [vmem:[%s1 + $0xa8] sm:$0xff]
    %v38 = vld [vmem:[%s1 + $0xb0] sm:$0xff]
    %v39 = vld [vmem:[%s1 + $0xb8] sm:$0xff]
    %v40 = vld [vmem:[%s1 + $0xc0] sm:$0xff]
    %v41 = vld [vmem:[%s1 + $0xc8] sm:$0xff]
    %v42 = vld [vmem:[%s1 + $0xd0] sm:$0xff]
    %v43 = vld [vmem:[%s1 + $0xd8] sm:$0xff]
    %v44 = vld [vmem:[%s1 + $0xe0] sm:$0xff]
    %v45 = vld [vmem:[%s1 + $0xe8] sm:$0xff]
    %v46 = vld [vmem:[%s1 + $0xf0] sm:$0xff]
    %v47 = vld [vmem:[%s1 + $0xf8] sm:$0xff]
    %48 = vmatprep.subr.mxu0 0.0
    %v49 = vand.u32 %v16, 4294901760
    %50 = vmatpush1.msra.mxu0 %v49
    %51 = vmatprep.subr.mxu0 0.0
    %v52 = vand.u32 %v17, 4294901760
    %53 = vmatpush1.msra.mxu0 %v52
    %54 = vmatprep.subr.mxu0 0.0
    %v55 = vand.u32 %v18, 4294901760
    %56 = vmatpush1.msra.mxu0 %v55
    %57 = vmatprep.subr.mxu0 0.0
    %v58 = vand.u32 %v19, 4294901760
    %59 = vmatpush1.msra.mxu0 %v58
    %60 = vmatprep.subr.mxu0 0.0
    %v61 = vand.u32 %v20, 4294901760
    %62 = vmatpush1.msra.mxu0 %v61
    %63 = vmatprep.subr.mxu0 0.0
    %v64 = vand.u32 %v21, 4294901760
    %65 = vmatpush1.msra.mxu0 %v64
    %66 = vmatprep.subr.mxu0 0.0
    %v67 = vand.u32 %v22, 4294901760
    %68 = vmatpush1.msra.mxu0 %v67
    %69 = vmatprep.subr.mxu0 0.0
    %v70 = vand.u32 %v23, 4294901760
    %71 = vmatpush1.msra.mxu0 %v70
    %72 = vmatprep.subr.mxu0 0.0
    %v73 = vand.u32 %v24, 4294901760
    %74 = vmatpush1.msra.mxu0 %v73
    %75 = vmatprep.subr.mxu0 0.0
    %v76 = vand.u32 %v25, 4294901760
    %77 = vmatpush1.msra.mxu0 %v76
    %78 = vmatprep.subr.mxu0 0.0
    %v79 = vand.u32 %v26, 4294901760
    %80 = vmatpush1.msra.mxu0 %v79
    %81 = vmatprep.subr.mxu0 0.0
    %v82 = vand.u32 %v27, 4294901760
    %83 = vmatpush1.msra.mxu0 %v82
    %84 = vmatprep.subr.mxu0 0.0
    %v85 = vand.u32 %v28, 4294901760
    %86 = vmatpush1.msra.mxu0 %v85
    %87 = vmatprep.subr.mxu0 0.0
    %v88 = vand.u32 %v29, 4294901760
    %89 = vmatpush1.msra.mxu0 %v88
    %90 = vmatprep.subr.mxu0 0.0
    %v91 = vand.u32 %v30, 4294901760
    %92 = vmatpush1.msra.mxu0 %v91
    %93 = vmatprep.subr.mxu0 0.0
    %v94 = vand.u32 %v31, 4294901760
    %95 = vmatpush1.msra.mxu0 %v94
    %96 = vmatprep.subr.mxu0 0.0
    %v97 = vand.u32 %v32, 4294901760
    %98 = vmatpush1.msra.mxu0 %v97
    %99 = vmatprep.subr.mxu0 0.0
    %v100 = vand.u32 %v33, 4294901760
    %101 = vmatpush1.msra.mxu0 %v100
    %102 = vmatprep.subr.mxu0 0.0
    %v103 = vand.u32 %v34, 4294901760
    %104 = vmatpush1.msra.mxu0 %v103
    %105 = vmatprep.subr.mxu0 0.0
    %v106 = vand.u32 %v35, 4294901760
    %107 = vmatpush1.msra.mxu0 %v106
    %108 = vmatprep.subr.mxu0 0.0
    %v109 = vand.u32 %v36, 4294901760
    %110 = vmatpush1.msra.mxu0 %v109
    %111 = vmatprep.subr.mxu0 0.0
    %v112 = vand.u32 %v37, 4294901760
    %113 = vmatpush1.msra.mxu0 %v112
    %114 = vmatprep.subr.mxu0 0.0
    %v115 = vand.u32 %v38, 4294901760
    %116 = vmatpush1.msra.mxu0 %v115
    %117 = vmatprep.subr.mxu0 0.0
    %v118 = vand.u32 %v39, 4294901760
    %119 = vmatpush1.msra.mxu0 %v118
    %120 = vmatprep.subr.mxu0 0.0
    %v121 = vand.u32 %v40, 4294901760
    %122 = vmatpush1.msra.mxu0 %v121
    %123 = vmatprep.subr.mxu0 0.0
    %v124 = vand.u32 %v41, 4294901760
    %125 = vmatpush1.msra.mxu0 %v124
    %126 = vmatprep.subr.mxu0 0.0
    %v127 = vand.u32 %v42, 4294901760
    %128 = vmatpush1.msra.mxu0 %v127
    %129 = vmatprep.subr.mxu0 0.0
    %v130 = vand.u32 %v43, 4294901760
    %131 = vmatpush1.msra.mxu0 %v130
    %132 = vmatprep.subr.mxu0 0.0
    %v133 = vand.u32 %v44, 4294901760
    %134 = vmatpush1.msra.mxu0 %v133
    %135 = vmatprep.subr.mxu0 0.0
    %v136 = vand.u32 %v45, 4294901760
    %137 = vmatpush1.msra.mxu0 %v136
    %138 = vmatprep.subr.mxu0 0.0
    %v139 = vand.u32 %v46, 4294901760
    %140 = vmatpush1.msra.mxu0 %v139
    %141 = vmatprep.subr.mxu0 0.0
    %v142 = vand.u32 %v47, 4294901760
    %143 = vmatpush1.msra.mxu0 %v142
    %v144 = vand.u32 %v15, 4294901760
    %v145 = vsub.f32 %v15, %v144
    %v146 = vand.u32 %v145, 4294901760
    %v147 = vsub.f32 %v145, %v146
    %v148 = vand.u32 %v147, 4294901760
    %149 = vmatprep.mubr.f32.mxu0 %v148
    %v150 = vand.u32 %v14, 4294901760
    %v151 = vsub.f32 %v14, %v150
    %v152 = vand.u32 %v151, 4294901760
    %v153 = vsub.f32 %v151, %v152
    %v154 = vand.u32 %v153, 4294901760
    %155 = vmatmul.mubr.f32.gmra.mrb[0].mxu0 %v154
    %v156 = vpop.f32.mrb[0].mxu0
    %v157 = vadd.f32 1e-12, %v156
    %v158 = vpop.f32.mrb[0].mxu0
    %159 = vdwg.mxu0
    %160 = vmatprep.subr.mxu0 0.0
    %v161 = vand.u32 %v16, 4294901760
    %v162 = vsub.f32 %v16, %v161
    %v163 = vand.u32 %v162, 4294901760
    %v164 = vsub.f32 %v162, %v163
    %v165 = vand.u32 %v164, 4294901760
    %166 = vmatpush1.msra.mxu0 %v165
    %167 = vmatprep.subr.mxu0 0.0
    %v168 = vand.u32 %v17, 4294901760
    %v169 = vsub.f32 %v17, %v168
    %v170 = vand.u32 %v169, 4294901760
    %v171 = vsub.f32 %v169, %v170
    %v172 = vand.u32 %v171, 4294901760
    %173 = vmatpush1.msra.mxu0 %v172
    %174 = vmatprep.subr.mxu0 0.0
    %v175 = vand.u32 %v18, 4294901760
    %v176 = vsub.f32 %v18, %v175
    %v177 = vand.u32 %v176, 4294901760
    %v178 = vsub.f32 %v176, %v177
    %v179 = vand.u32 %v178, 4294901760
    %180 = vmatpush1.msra.mxu0 %v179
    %181 = vmatprep.subr.mxu0 0.0
    %v182 = vand.u32 %v19, 4294901760
    %v183 = vsub.f32 %v19, %v182
    %v184 = vand.u32 %v183, 4294901760
    %v185 = vsub.f32 %v183, %v184
    %v186 = vand.u32 %v185, 4294901760
    %187 = vmatpush1.msra.mxu0 %v186
    %188 = vmatprep.subr.mxu0 0.0
    %v189 = vand.u32 %v20, 4294901760
    %v190 = vsub.f32 %v20, %v189
    %v191 = vand.u32 %v190, 4294901760
    %v192 = vsub.f32 %v190, %v191
    %v193 = vand.u32 %v192, 4294901760
    %194 = vmatpush1.msra.mxu0 %v193
    %195 = vmatprep.subr.mxu0 0.0
    %v196 = vand.u32 %v21, 4294901760
    %v197 = vsub.f32 %v21, %v196
    %v198 = vand.u32 %v197, 4294901760
    %v199 = vsub.f32 %v197, %v198
    %v200 = vand.u32 %v199, 4294901760
    %201 = vmatpush1.msra.mxu0 %v200
    %202 = vmatprep.subr.mxu0 0.0
    %v203 = vand.u32 %v22, 4294901760
    %v204 = vsub.f32 %v22, %v203
    %v205 = vand.u32 %v204, 4294901760
    %v206 = vsub.f32 %v204, %v205
    %v207 = vand.u32 %v206, 4294901760
    %208 = vmatpush1.msra.mxu0 %v207
    %209 = vmatprep.subr.mxu0 0.0
    %v210 = vand.u32 %v23, 4294901760
    %v211 = vsub.f32 %v23, %v210
    %v212 = vand.u32 %v211, 4294901760
    %v213 = vsub.f32 %v211, %v212
    %v214 = vand.u32 %v213, 4294901760
    %215 = vmatpush1.msra.mxu0 %v214
    %216 = vmatprep.subr.mxu0 0.0
    %v217 = vand.u32 %v24, 4294901760
    %v218 = vsub.f32 %v24, %v217
    %v219 = vand.u32 %v218, 4294901760
    %v220 = vsub.f32 %v218, %v219
    %v221 = vand.u32 %v220, 4294901760
    %222 = vmatpush1.msra.mxu0 %v221
    %223 = vmatprep.subr.mxu0 0.0
    %v224 = vand.u32 %v25, 4294901760
    %v225 = vsub.f32 %v25, %v224
    %v226 = vand.u32 %v225, 4294901760
    %v227 = vsub.f32 %v225, %v226
    %v228 = vand.u32 %v227, 4294901760
    %229 = vmatpush1.msra.mxu0 %v228
    %230 = vmatprep.subr.mxu0 0.0
    %v231 = vand.u32 %v26, 4294901760
    %v232 = vsub.f32 %v26, %v231
    %v233 = vand.u32 %v232, 4294901760
    %v234 = vsub.f32 %v232, %v233
    %v235 = vand.u32 %v234, 4294901760
    %236 = vmatpush1.msra.mxu0 %v235
    %237 = vmatprep.subr.mxu0 0.0
    %v238 = vand.u32 %v27, 4294901760
    %v239 = vsub.f32 %v27, %v238
    %v240 = vand.u32 %v239, 4294901760
    %v241 = vsub.f32 %v239, %v240
    %v242 = vand.u32 %v241, 4294901760
    %243 = vmatpush1.msra.mxu0 %v242
    %244 = vmatprep.subr.mxu0 0.0
    %v245 = vand.u32 %v28, 4294901760
    %v246 = vsub.f32 %v28, %v245
    %v247 = vand.u32 %v246, 4294901760
    %v248 = vsub.f32 %v246, %v247
    %v249 = vand.u32 %v248, 4294901760
    %250 = vmatpush1.msra.mxu0 %v249
    %251 = vmatprep.subr.mxu0 0.0
    %v252 = vand.u32 %v29, 4294901760
    %v253 = vsub.f32 %v29, %v252
    %v254 = vand.u32 %v253, 4294901760
    %v255 = vsub.f32 %v253, %v254
    %v256 = vand.u32 %v255, 4294901760
    %257 = vmatpush1.msra.mxu0 %v256
    %258 = vmatprep.subr.mxu0 0.0
    %v259 = vand.u32 %v30, 4294901760
    %v260 = vsub.f32 %v30, %v259
    %v261 = vand.u32 %v260, 4294901760
    %v262 = vsub.f32 %v260, %v261
    %v263 = vand.u32 %v262, 4294901760
    %264 = vmatpush1.msra.mxu0 %v263
    %265 = vmatprep.subr.mxu0 0.0
    %v266 = vand.u32 %v31, 4294901760
    %v267 = vsub.f32 %v31, %v266
    %v268 = vand.u32 %v267, 4294901760
    %v269 = vsub.f32 %v267, %v268
    %v270 = vand.u32 %v269, 4294901760
    %271 = vmatpush1.msra.mxu0 %v270
    %272 = vmatprep.subr.mxu0 0.0
    %v273 = vand.u32 %v32, 4294901760
    %v274 = vsub.f32 %v32, %v273
    %v275 = vand.u32 %v274, 4294901760
    %v276 = vsub.f32 %v274, %v275
    %v277 = vand.u32 %v276, 4294901760
    %278 = vmatpush1.msra.mxu0 %v277
    %279 = vmatprep.subr.mxu0 0.0
    %v280 = vand.u32 %v33, 4294901760
    %v281 = vsub.f32 %v33, %v280
    %v282 = vand.u32 %v281, 4294901760
    %v283 = vsub.f32 %v281, %v282
    %v284 = vand.u32 %v283, 4294901760
    %285 = vmatpush1.msra.mxu0 %v284
    %286 = vmatprep.subr.mxu0 0.0
    %v287 = vand.u32 %v34, 4294901760
    %v288 = vsub.f32 %v34, %v287
    %v289 = vand.u32 %v288, 4294901760
    %v290 = vsub.f32 %v288, %v289
    %v291 = vand.u32 %v290, 4294901760
    %292 = vmatpush1.msra.mxu0 %v291
    %293 = vmatprep.subr.mxu0 0.0
    %v294 = vand.u32 %v35, 4294901760
    %v295 = vsub.f32 %v35, %v294
    %v296 = vand.u32 %v295, 4294901760
    %v297 = vsub.f32 %v295, %v296
    %v298 = vand.u32 %v297, 4294901760
    %299 = vmatpush1.msra.mxu0 %v298
    %300 = vmatprep.subr.mxu0 0.0
    %v301 = vand.u32 %v36, 4294901760
    %v302 = vsub.f32 %v36, %v301
    %v303 = vand.u32 %v302, 4294901760
    %v304 = vsub.f32 %v302, %v303
    %v305 = vand.u32 %v304, 4294901760
    %306 = vmatpush1.msra.mxu0 %v305
    %307 = vmatprep.subr.mxu0 0.0
    %v308 = vand.u32 %v37, 4294901760
    %v309 = vsub.f32 %v37, %v308
    %v310 = vand.u32 %v309, 4294901760
    %v311 = vsub.f32 %v309, %v310
    %v312 = vand.u32 %v311, 4294901760
    %313 = vmatpush1.msra.mxu0 %v312
    %314 = vmatprep.subr.mxu0 0.0
    %v315 = vand.u32 %v38, 4294901760
    %v316 = vsub.f32 %v38, %v315
    %v317 = vand.u32 %v316, 4294901760
    %v318 = vsub.f32 %v316, %v317
    %v319 = vand.u32 %v318, 4294901760
    %320 = vmatpush1.msra.mxu0 %v319
    %321 = vmatprep.subr.mxu0 0.0
    %v322 = vand.u32 %v39, 4294901760
    %v323 = vsub.f32 %v39, %v322
    %v324 = vand.u32 %v323, 4294901760
    %v325 = vsub.f32 %v323, %v324
    %v326 = vand.u32 %v325, 4294901760
    %327 = vmatpush1.msra.mxu0 %v326
    %328 = vmatprep.subr.mxu0 0.0
    %v329 = vand.u32 %v40, 4294901760
    %v330 = vsub.f32 %v40, %v329
    %v331 = vand.u32 %v330, 4294901760
    %v332 = vsub.f32 %v330, %v331
    %v333 = vand.u32 %v332, 4294901760
    %334 = vmatpush1.msra.mxu0 %v333
    %335 = vmatprep.subr.mxu0 0.0
    %v336 = vand.u32 %v41, 4294901760
    %v337 = vsub.f32 %v41, %v336
    %v338 = vand.u32 %v337, 4294901760
    %v339 = vsub.f32 %v337, %v338
    %v340 = vand.u32 %v339, 4294901760
    %341 = vmatpush1.msra.mxu0 %v340
    %342 = vmatprep.subr.mxu0 0.0
    %v343 = vand.u32 %v42, 4294901760
    %v344 = vsub.f32 %v42, %v343
    %v345 = vand.u32 %v344, 4294901760
    %v346 = vsub.f32 %v344, %v345
    %v347 = vand.u32 %v346, 4294901760
    %348 = vmatpush1.msra.mxu0 %v347
    %349 = vmatprep.subr.mxu0 0.0
    %v350 = vand.u32 %v43, 4294901760
    %v351 = vsub.f32 %v43, %v350
    %v352 = vand.u32 %v351, 4294901760
    %v353 = vsub.f32 %v351, %v352
    %v354 = vand.u32 %v353, 4294901760
    %355 = vmatpush1.msra.mxu0 %v354
    %356 = vmatprep.subr.mxu0 0.0
    %v357 = vand.u32 %v44, 4294901760
    %v358 = vsub.f32 %v44, %v357
    %v359 = vand.u32 %v358, 4294901760
    %v360 = vsub.f32 %v358, %v359
    %v361 = vand.u32 %v360, 4294901760
    %362 = vmatpush1.msra.mxu0 %v361
    %363 = vmatprep.subr.mxu0 0.0
    %v364 = vand.u32 %v45, 4294901760
    %v365 = vsub.f32 %v45, %v364
    %v366 = vand.u32 %v365, 4294901760
    %v367 = vsub.f32 %v365, %v366
    %v368 = vand.u32 %v367, 4294901760
    %369 = vmatpush1.msra.mxu0 %v368
    %370 = vmatprep.subr.mxu0 0.0
    %v371 = vand.u32 %v46, 4294901760
    %v372 = vsub.f32 %v46, %v371
    %v373 = vand.u32 %v372, 4294901760
    %v374 = vsub.f32 %v372, %v373
    %v375 = vand.u32 %v374, 4294901760
    %376 = vmatpush1.msra.mxu0 %v375
    %377 = vmatprep.subr.mxu0 0.0
    %v378 = vand.u32 %v47, 4294901760
    %v379 = vsub.f32 %v47, %v378
    %v380 = vand.u32 %v379, 4294901760
    %v381 = vsub.f32 %v379, %v380
    %v382 = vand.u32 %v381, 4294901760
    %383 = vmatpush1.msra.mxu0 %v382
    %v384 = vand.u32 %v15, 4294901760
    %385 = vmatprep.mubr.f32.mxu0 %v384
    %v386 = vand.u32 %v14, 4294901760
    %387 = vmatmul.mubr.f32.gmra.mrb[0].mxu0 %v386
    %v388 = vpop.f32.mrb[0].mxu0
    %v389 = vadd.f32 %v157, %v388
    %v390 = vpop.f32.mrb[0].mxu0
    %391 = vdwg.mxu0
    %392 = vmatprep.subr.mxu0 0.0
    %v393 = vand.u32 %v16, 4294901760
    %v394 = vsub.f32 %v16, %v393
    %395 = vmatpush1.msra.mxu0 %v394
    %396 = vmatprep.subr.mxu0 0.0
    %v397 = vand.u32 %v17, 4294901760
    %v398 = vsub.f32 %v17, %v397
    %399 = vmatpush1.msra.mxu0 %v398
    %400 = vmatprep.subr.mxu0 0.0
    %v401 = vand.u32 %v18, 4294901760
    %v402 = vsub.f32 %v18, %v401
    %403 = vmatpush1.msra.mxu0 %v402
    %404 = vmatprep.subr.mxu0 0.0
    %v405 = vand.u32 %v19, 4294901760
    %v406 = vsub.f32 %v19, %v405
    %407 = vmatpush1.msra.mxu0 %v406
    %408 = vmatprep.subr.mxu0 0.0
    %v409 = vand.u32 %v20, 4294901760
    %v410 = vsub.f32 %v20, %v409
    %411 = vmatpush1.msra.mxu0 %v410
    %412 = vmatprep.subr.mxu0 0.0
    %v413 = vand.u32 %v21, 4294901760
    %v414 = vsub.f32 %v21, %v413
    %415 = vmatpush1.msra.mxu0 %v414
    %416 = vmatprep.subr.mxu0 0.0
    %v417 = vand.u32 %v22, 4294901760
    %v418 = vsub.f32 %v22, %v417
    %419 = vmatpush1.msra.mxu0 %v418
    %420 = vmatprep.subr.mxu0 0.0
    %v421 = vand.u32 %v23, 4294901760
    %v422 = vsub.f32 %v23, %v421
    %423 = vmatpush1.msra.mxu0 %v422
    %424 = vmatprep.subr.mxu0 0.0
    %v425 = vand.u32 %v24, 4294901760
    %v426 = vsub.f32 %v24, %v425
    %427 = vmatpush1.msra.mxu0 %v426
    %428 = vmatprep.subr.mxu0 0.0
    %v429 = vand.u32 %v25, 4294901760
    %v430 = vsub.f32 %v25, %v429
    %431 = vmatpush1.msra.mxu0 %v430
    %432 = vmatprep.subr.mxu0 0.0
    %v433 = vand.u32 %v26, 4294901760
    %v434 = vsub.f32 %v26, %v433
    %435 = vmatpush1.msra.mxu0 %v434
    %436 = vmatprep.subr.mxu0 0.0
    %v437 = vand.u32 %v27, 4294901760
    %v438 = vsub.f32 %v27, %v437
    %439 = vmatpush1.msra.mxu0 %v438
    %440 = vmatprep.subr.mxu0 0.0
    %v441 = vand.u32 %v28, 4294901760
    %v442 = vsub.f32 %v28, %v441
    %443 = vmatpush1.msra.mxu0 %v442
    %444 = vmatprep.subr.mxu0 0.0
    %v445 = vand.u32 %v29, 4294901760
    %v446 = vsub.f32 %v29, %v445
    %447 = vmatpush1.msra.mxu0 %v446
    %448 = vmatprep.subr.mxu0 0.0
    %v449 = vand.u32 %v30, 4294901760
    %v450 = vsub.f32 %v30, %v449
    %451 = vmatpush1.msra.mxu0 %v450
    %452 = vmatprep.subr.mxu0 0.0
    %v453 = vand.u32 %v31, 4294901760
    %v454 = vsub.f32 %v31, %v453
    %455 = vmatpush1.msra.mxu0 %v454
    %456 = vmatprep.subr.mxu0 0.0
    %v457 = vand.u32 %v32, 4294901760
    %v458 = vsub.f32 %v32, %v457
    %459 = vmatpush1.msra.mxu0 %v458
    %460 = vmatprep.subr.mxu0 0.0
    %v461 = vand.u32 %v33, 4294901760
    %v462 = vsub.f32 %v33, %v461
    %463 = vmatpush1.msra.mxu0 %v462
    %464 = vmatprep.subr.mxu0 0.0
    %v465 = vand.u32 %v34, 4294901760
    %v466 = vsub.f32 %v34, %v465
    %467 = vmatpush1.msra.mxu0 %v466
    %468 = vmatprep.subr.mxu0 0.0
    %v469 = vand.u32 %v35, 4294901760
    %v470 = vsub.f32 %v35, %v469
    %471 = vmatpush1.msra.mxu0 %v470
    %472 = vmatprep.subr.mxu0 0.0
    %v473 = vand.u32 %v36, 4294901760
    %v474 = vsub.f32 %v36, %v473
    %475 = vmatpush1.msra.mxu0 %v474
    %476 = vmatprep.subr.mxu0 0.0
    %v477 = vand.u32 %v37, 4294901760
    %v478 = vsub.f32 %v37, %v477
    %479 = vmatpush1.msra.mxu0 %v478
    %480 = vmatprep.subr.mxu0 0.0
    %v481 = vand.u32 %v38, 4294901760
    %v482 = vsub.f32 %v38, %v481
    %483 = vmatpush1.msra.mxu0 %v482
    %484 = vmatprep.subr.mxu0 0.0
    %v485 = vand.u32 %v39, 4294901760
    %v486 = vsub.f32 %v39, %v485
    %487 = vmatpush1.msra.mxu0 %v486
    %488 = vmatprep.subr.mxu0 0.0
    %v489 = vand.u32 %v40, 4294901760
    %v490 = vsub.f32 %v40, %v489
    %491 = vmatpush1.msra.mxu0 %v490
    %492 = vmatprep.subr.mxu0 0.0
    %v493 = vand.u32 %v41, 4294901760
    %v494 = vsub.f32 %v41, %v493
    %495 = vmatpush1.msra.mxu0 %v494
    %496 = vmatprep.subr.mxu0 0.0
    %v497 = vand.u32 %v42, 4294901760
    %v498 = vsub.f32 %v42, %v497
    %499 = vmatpush1.msra.mxu0 %v498
    %500 = vmatprep.subr.mxu0 0.0
    %v501 = vand.u32 %v43, 4294901760
    %v502 = vsub.f32 %v43, %v501
    %503 = vmatpush1.msra.mxu0 %v502
    %504 = vmatprep.subr.mxu0 0.0
    %v505 = vand.u32 %v44, 4294901760
    %v506 = vsub.f32 %v44, %v505
    %507 = vmatpush1.msra.mxu0 %v506
    %508 = vmatprep.subr.mxu0 0.0
    %v509 = vand.u32 %v45, 4294901760
    %v510 = vsub.f32 %v45, %v509
    %511 = vmatpush1.msra.mxu0 %v510
    %512 = vmatprep.subr.mxu0 0.0
    %v513 = vand.u32 %v46, 4294901760
    %v514 = vsub.f32 %v46, %v513
    %515 = vmatpush1.msra.mxu0 %v514
    %516 = vmatprep.subr.mxu0 0.0
    %v517 = vand.u32 %v47, 4294901760
    %v518 = vsub.f32 %v47, %v517
    %519 = vmatpush1.msra.mxu0 %v518
    %v520 = vand.u32 %v15, 4294901760
    %v521 = vsub.f32 %v15, %v520
    %522 = vmatprep.mubr.f32.mxu0 %v521
    %v523 = vand.u32 %v14, 4294901760
    %v524 = vsub.f32 %v14, %v523
    %525 = vmatmul.mubr.f32.gmra.mrb[0].mxu0 %v524
    %v526 = vpop.f32.mrb[0].mxu0
    %v527 = vadd.f32 %v389, %v526
    %v528 = vpop.f32.mrb[0].mxu0
    %529 = vdwg.mxu0
    %530 = vmatprep.subr.mxu0 0.0
    %v531 = vand.u32 %v16, 4294901760
    %532 = vmatpush1.msra.mxu0 %v531
    %533 = vmatprep.subr.mxu0 0.0
    %v534 = vand.u32 %v17, 4294901760
    %535 = vmatpush1.msra.mxu0 %v534
    %536 = vmatprep.subr.mxu0 0.0
    %v537 = vand.u32 %v18, 4294901760
    %538 = vmatpush1.msra.mxu0 %v537
    %539 = vmatprep.subr.mxu0 0.0
    %v540 = vand.u32 %v19, 4294901760
    %541 = vmatpush1.msra.mxu0 %v540
    %542 = vmatprep.subr.mxu0 0.0
    %v543 = vand.u32 %v20, 4294901760
    %544 = vmatpush1.msra.mxu0 %v543
    %545 = vmatprep.subr.mxu0 0.0
    %v546 = vand.u32 %v21, 4294901760
    %547 = vmatpush1.msra.mxu0 %v546
    %548 = vmatprep.subr.mxu0 0.0
    %v549 = vand.u32 %v22, 4294901760
    %550 = vmatpush1.msra.mxu0 %v549
    %551 = vmatprep.subr.mxu0 0.0
    %v552 = vand.u32 %v23, 4294901760
    %553 = vmatpush1.msra.mxu0 %v552
    %554 = vmatprep.subr.mxu0 0.0
    %v555 = vand.u32 %v24, 4294901760
    %556 = vmatpush1.msra.mxu0 %v555
    %557 = vmatprep.subr.mxu0 0.0
    %v558 = vand.u32 %v25, 4294901760
    %559 = vmatpush1.msra.mxu0 %v558
    %560 = vmatprep.subr.mxu0 0.0
    %v561 = vand.u32 %v26, 4294901760
    %562 = vmatpush1.msra.mxu0 %v561
    %563 = vmatprep.subr.mxu0 0.0
    %v564 = vand.u32 %v27, 4294901760
    %565 = vmatpush1.msra.mxu0 %v564
    %566 = vmatprep.subr.mxu0 0.0
    %v567 = vand.u32 %v28, 4294901760
    %568 = vmatpush1.msra.mxu0 %v567
    %569 = vmatprep.subr.mxu0 0.0
    %v570 = vand.u32 %v29, 4294901760
    %571 = vmatpush1.msra.mxu0 %v570
    %572 = vmatprep.subr.mxu0 0.0
    %v573 = vand.u32 %v30, 4294901760
    %574 = vmatpush1.msra.mxu0 %v573
    %575 = vmatprep.subr.mxu0 0.0
    %v576 = vand.u32 %v31, 4294901760
    %577 = vmatpush1.msra.mxu0 %v576
    %578 = vmatprep.subr.mxu0 0.0
    %v579 = vand.u32 %v32, 4294901760
    %580 = vmatpush1.msra.mxu0 %v579
    %581 = vmatprep.subr.mxu0 0.0
    %v582 = vand.u32 %v33, 4294901760
    %583 = vmatpush1.msra.mxu0 %v582
    %584 = vmatprep.subr.mxu0 0.0
    %v585 = vand.u32 %v34, 4294901760
    %586 = vmatpush1.msra.mxu0 %v585
    %587 = vmatprep.subr.mxu0 0.0
    %v588 = vand.u32 %v35, 4294901760
    %589 = vmatpush1.msra.mxu0 %v588
    %590 = vmatprep.subr.mxu0 0.0
    %v591 = vand.u32 %v36, 4294901760
    %592 = vmatpush1.msra.mxu0 %v591
    %593 = vmatprep.subr.mxu0 0.0
    %v594 = vand.u32 %v37, 4294901760
    %595 = vmatpush1.msra.mxu0 %v594
    %596 = vmatprep.subr.mxu0 0.0
    %v597 = vand.u32 %v38, 4294901760
    %598 = vmatpush1.msra.mxu0 %v597
    %599 = vmatprep.subr.mxu0 0.0
    %v600 = vand.u32 %v39, 4294901760
    %601 = vmatpush1.msra.mxu0 %v600
    %602 = vmatprep.subr.mxu0 0.0
    %v603 = vand.u32 %v40, 4294901760
    %604 = vmatpush1.msra.mxu0 %v603
    %605 = vmatprep.subr.mxu0 0.0
    %v606 = vand.u32 %v41, 4294901760
    %607 = vmatpush1.msra.mxu0 %v606
    %608 = vmatprep.subr.mxu0 0.0
    %v609 = vand.u32 %v42, 4294901760
    %610 = vmatpush1.msra.mxu0 %v609
    %611 = vmatprep.subr.mxu0 0.0
    %v612 = vand.u32 %v43, 4294901760
    %613 = vmatpush1.msra.mxu0 %v612
    %614 = vmatprep.subr.mxu0 0.0
    %v615 = vand.u32 %v44, 4294901760
    %616 = vmatpush1.msra.mxu0 %v615
    %617 = vmatprep.subr.mxu0 0.0
    %v618 = vand.u32 %v45, 4294901760
    %619 = vmatpush1.msra.mxu0 %v618
    %620 = vmatprep.subr.mxu0 0.0
    %v621 = vand.u32 %v46, 4294901760
    %622 = vmatpush1.msra.mxu0 %v621
    %623 = vmatprep.subr.mxu0 0.0
    %v624 = vand.u32 %v47, 4294901760
    %625 = vmatpush1.msra.mxu0 %v624
    %v626 = vand.u32 %v15, 4294901760
    %v627 = vsub.f32 %v15, %v626
    %v628 = vand.u32 %v627, 4294901760
    %629 = vmatprep.mubr.f32.mxu0 %v628
    %v630 = vand.u32 %v14, 4294901760
    %v631 = vsub.f32 %v14, %v630
    %v632 = vand.u32 %v631, 4294901760
    %633 = vmatmul.mubr.f32.gmra.mrb[0].mxu0 %v632
    %v634 = vpop.f32.mrb[0].mxu0
    %v635 = vadd.f32 %v527, %v634
    %v636 = vpop.f32.mrb[0].mxu0
    %637 = vdwg.mxu0
    %638 = vmatprep.subr.mxu0 0.0
    %v639 = vand.u32 %v16, 4294901760
    %v640 = vsub.f32 %v16, %v639
    %v641 = vand.u32 %v640, 4294901760
    %642 = vmatpush1.msra.mxu0 %v641
    %643 = vmatprep.subr.mxu0 0.0
    %v644 = vand.u32 %v17, 4294901760
    %v645 = vsub.f32 %v17, %v644
    %v646 = vand.u32 %v645, 4294901760
    %647 = vmatpush1.msra.mxu0 %v646
    %648 = vmatprep.subr.mxu0 0.0
    %v649 = vand.u32 %v18, 4294901760
    %v650 = vsub.f32 %v18, %v649
    %v651 = vand.u32 %v650, 4294901760
    %652 = vmatpush1.msra.mxu0 %v651
    %653 = vmatprep.subr.mxu0 0.0
    %v654 = vand.u32 %v19, 4294901760
    %v655 = vsub.f32 %v19, %v654
    %v656 = vand.u32 %v655, 4294901760
    %657 = vmatpush1.msra.mxu0 %v656
    %658 = vmatprep.subr.mxu0 0.0
    %v659 = vand.u32 %v20, 4294901760
    %v660 = vsub.f32 %v20, %v659
    %v661 = vand.u32 %v660, 4294901760
    %662 = vmatpush1.msra.mxu0 %v661
    %663 = vmatprep.subr.mxu0 0.0
    %v664 = vand.u32 %v21, 4294901760
    %v665 = vsub.f32 %v21, %v664
    %v666 = vand.u32 %v665, 4294901760
    %667 = vmatpush1.msra.mxu0 %v666
    %668 = vmatprep.subr.mxu0 0.0
    %v669 = vand.u32 %v22, 4294901760
    %v670 = vsub.f32 %v22, %v669
    %v671 = vand.u32 %v670, 4294901760
    %672 = vmatpush1.msra.mxu0 %v671
    %673 = vmatprep.subr.mxu0 0.0
    %v674 = vand.u32 %v23, 4294901760
    %v675 = vsub.f32 %v23, %v674
    %v676 = vand.u32 %v675, 4294901760
    %677 = vmatpush1.msra.mxu0 %v676
    %678 = vmatprep.subr.mxu0 0.0
    %v679 = vand.u32 %v24, 4294901760
    %v680 = vsub.f32 %v24, %v679
    %v681 = vand.u32 %v680, 4294901760
    %682 = vmatpush1.msra.mxu0 %v681
    %683 = vmatprep.subr.mxu0 0.0
    %v684 = vand.u32 %v25, 4294901760
    %v685 = vsub.f32 %v25, %v684
    %v686 = vand.u32 %v685, 4294901760
    %687 = vmatpush1.msra.mxu0 %v686
    %688 = vmatprep.subr.mxu0 0.0
    %v689 = vand.u32 %v26, 4294901760
    %v690 = vsub.f32 %v26, %v689
    %v691 = vand.u32 %v690, 4294901760
    %692 = vmatpush1.msra.mxu0 %v691
    %693 = vmatprep.subr.mxu0 0.0
    %v694 = vand.u32 %v27, 4294901760
    %v695 = vsub.f32 %v27, %v694
    %v696 = vand.u32 %v695, 4294901760
    %697 = vmatpush1.msra.mxu0 %v696
    %698 = vmatprep.subr.mxu0 0.0
    %v699 = vand.u32 %v28, 4294901760
    %v700 = vsub.f32 %v28, %v699
    %v701 = vand.u32 %v700, 4294901760
    %702 = vmatpush1.msra.mxu0 %v701
    %703 = vmatprep.subr.mxu0 0.0
    %v704 = vand.u32 %v29, 4294901760
    %v705 = vsub.f32 %v29, %v704
    %v706 = vand.u32 %v705, 4294901760
    %707 = vmatpush1.msra.mxu0 %v706
    %708 = vmatprep.subr.mxu0 0.0
    %v709 = vand.u32 %v30, 4294901760
    %v710 = vsub.f32 %v30, %v709
    %v711 = vand.u32 %v710, 4294901760
    %712 = vmatpush1.msra.mxu0 %v711
    %713 = vmatprep.subr.mxu0 0.0
    %v714 = vand.u32 %v31, 4294901760
    %v715 = vsub.f32 %v31, %v714
    %v716 = vand.u32 %v715, 4294901760
    %717 = vmatpush1.msra.mxu0 %v716
    %718 = vmatprep.subr.mxu0 0.0
    %v719 = vand.u32 %v32, 4294901760
    %v720 = vsub.f32 %v32, %v719
    %v721 = vand.u32 %v720, 4294901760
    %722 = vmatpush1.msra.mxu0 %v721
    %723 = vmatprep.subr.mxu0 0.0
    %v724 = vand.u32 %v33, 4294901760
    %v725 = vsub.f32 %v33, %v724
    %v726 = vand.u32 %v725, 4294901760
    %727 = vmatpush1.msra.mxu0 %v726
    %728 = vmatprep.subr.mxu0 0.0
    %v729 = vand.u32 %v34, 4294901760
    %v730 = vsub.f32 %v34, %v729
    %v731 = vand.u32 %v730, 4294901760
    %732 = vmatpush1.msra.mxu0 %v731
    %733 = vmatprep.subr.mxu0 0.0
    %v734 = vand.u32 %v35, 4294901760
    %v735 = vsub.f32 %v35, %v734
    %v736 = vand.u32 %v735, 4294901760
    %737 = vmatpush1.msra.mxu0 %v736
    %738 = vmatprep.subr.mxu0 0.0
    %v739 = vand.u32 %v36, 4294901760
    %v740 = vsub.f32 %v36, %v739
    %v741 = vand.u32 %v740, 4294901760
    %742 = vmatpush1.msra.mxu0 %v741
    %743 = vmatprep.subr.mxu0 0.0
    %v744 = vand.u32 %v37, 4294901760
    %v745 = vsub.f32 %v37, %v744
    %v746 = vand.u32 %v745, 4294901760
    %747 = vmatpush1.msra.mxu0 %v746
    %748 = vmatprep.subr.mxu0 0.0
    %v749 = vand.u32 %v38, 4294901760
    %v750 = vsub.f32 %v38, %v749
    %v751 = vand.u32 %v750, 4294901760
    %752 = vmatpush1.msra.mxu0 %v751
    %753 = vmatprep.subr.mxu0 0.0
    %v754 = vand.u32 %v39, 4294901760
    %v755 = vsub.f32 %v39, %v754
    %v756 = vand.u32 %v755, 4294901760
    %757 = vmatpush1.msra.mxu0 %v756
    %758 = vmatprep.subr.mxu0 0.0
    %v759 = vand.u32 %v40, 4294901760
    %v760 = vsub.f32 %v40, %v759
    %v761 = vand.u32 %v760, 4294901760
    %762 = vmatpush1.msra.mxu0 %v761
    %763 = vmatprep.subr.mxu0 0.0
    %v764 = vand.u32 %v41, 4294901760
    %v765 = vsub.f32 %v41, %v764
    %v766 = vand.u32 %v765, 4294901760
    %767 = vmatpush1.msra.mxu0 %v766
    %768 = vmatprep.subr.mxu0 0.0
    %v769 = vand.u32 %v42, 4294901760
    %v770 = vsub.f32 %v42, %v769
    %v771 = vand.u32 %v770, 4294901760
    %772 = vmatpush1.msra.mxu0 %v771
    %773 = vmatprep.subr.mxu0 0.0
    %v774 = vand.u32 %v43, 4294901760
    %v775 = vsub.f32 %v43, %v774
    %v776 = vand.u32 %v775, 4294901760
    %777 = vmatpush1.msra.mxu0 %v776
    %778 = vmatprep.subr.mxu0 0.0
    %v779 = vand.u32 %v44, 4294901760
    %v780 = vsub.f32 %v44, %v779
    %v781 = vand.u32 %v780, 4294901760
    %782 = vmatpush1.msra.mxu0 %v781
    %783 = vmatprep.subr.mxu0 0.0
    %v784 = vand.u32 %v45, 4294901760
    %v785 = vsub.f32 %v45, %v784
    %v786 = vand.u32 %v785, 4294901760
    %787 = vmatpush1.msra.mxu0 %v786
    %788 = vmatprep.subr.mxu0 0.0
    %v789 = vand.u32 %v46, 4294901760
    %v790 = vsub.f32 %v46, %v789
    %v791 = vand.u32 %v790, 4294901760
    %792 = vmatpush1.msra.mxu0 %v791
    %793 = vmatprep.subr.mxu0 0.0
    %v794 = vand.u32 %v47, 4294901760
    %v795 = vsub.f32 %v47, %v794
    %v796 = vand.u32 %v795, 4294901760
    %797 = vmatpush1.msra.mxu0 %v796
    %v798 = vand.u32 %v15, 4294901760
    %799 = vmatprep.mubr.f32.mxu0 %v798
    %v800 = vand.u32 %v14, 4294901760
    %801 = vmatmul.mubr.f32.gmra.mrb[0].mxu0 %v800
    %v802 = vpop.f32.mrb[0].mxu0
    %v803 = vadd.f32 %v635, %v802
    %v804 = vpop.f32.mrb[0].mxu0
    %805 = vdwg.mxu0
    %806 = vmatprep.subr.mxu0 0.0
    %v807 = vand.u32 %v16, 4294901760
    %808 = vmatpush1.msra.mxu0 %v807
    %809 = vmatprep.subr.mxu0 0.0
    %v810 = vand.u32 %v17, 4294901760
    %811 = vmatpush1.msra.mxu0 %v810
    %812 = vmatprep.subr.mxu0 0.0
    %v813 = vand.u32 %v18, 4294901760
    %814 = vmatpush1.msra.mxu0 %v813
    %815 = vmatprep.subr.mxu0 0.0
    %v816 = vand.u32 %v19, 4294901760
    %817 = vmatpush1.msra.mxu0 %v816
    %818 = vmatprep.subr.mxu0 0.0
    %v819 = vand.u32 %v20, 4294901760
    %820 = vmatpush1.msra.mxu0 %v819
    %821 = vmatprep.subr.mxu0 0.0
    %v822 = vand.u32 %v21, 4294901760
    %823 = vmatpush1.msra.mxu0 %v822
    %824 = vmatprep.subr.mxu0 0.0
    %v825 = vand.u32 %v22, 4294901760
    %826 = vmatpush1.msra.mxu0 %v825
    %827 = vmatprep.subr.mxu0 0.0
    %v828 = vand.u32 %v23, 4294901760
    %829 = vmatpush1.msra.mxu0 %v828
    %830 = vmatprep.subr.mxu0 0.0
    %v831 = vand.u32 %v24, 4294901760
    %832 = vmatpush1.msra.mxu0 %v831
    %833 = vmatprep.subr.mxu0 0.0
    %v834 = vand.u32 %v25, 4294901760
    %835 = vmatpush1.msra.mxu0 %v834
    %836 = vmatprep.subr.mxu0 0.0
    %v837 = vand.u32 %v26, 4294901760
    %838 = vmatpush1.msra.mxu0 %v837
    %839 = vmatprep.subr.mxu0 0.0
    %v840 = vand.u32 %v27, 4294901760
    %841 = vmatpush1.msra.mxu0 %v840
    %842 = vmatprep.subr.mxu0 0.0
    %v843 = vand.u32 %v28, 4294901760
    %844 = vmatpush1.msra.mxu0 %v843
    %845 = vmatprep.subr.mxu0 0.0
    %v846 = vand.u32 %v29, 4294901760
    %847 = vmatpush1.msra.mxu0 %v846
    %848 = vmatprep.subr.mxu0 0.0
    %v849 = vand.u32 %v30, 4294901760
    %850 = vmatpush1.msra.mxu0 %v849
    %851 = vmatprep.subr.mxu0 0.0
    %v852 = vand.u32 %v31, 4294901760
    %853 = vmatpush1.msra.mxu0 %v852
    %854 = vmatprep.subr.mxu0 0.0
    %v855 = vand.u32 %v32, 4294901760
    %856 = vmatpush1.msra.mxu0 %v855
    %857 = vmatprep.subr.mxu0 0.0
    %v858 = vand.u32 %v33, 4294901760
    %859 = vmatpush1.msra.mxu0 %v858
    %860 = vmatprep.subr.mxu0 0.0
    %v861 = vand.u32 %v34, 4294901760
    %862 = vmatpush1.msra.mxu0 %v861
    %863 = vmatprep.subr.mxu0 0.0
    %v864 = vand.u32 %v35, 4294901760
    %865 = vmatpush1.msra.mxu0 %v864
    %866 = vmatprep.subr.mxu0 0.0
    %v867 = vand.u32 %v36, 4294901760
    %868 = vmatpush1.msra.mxu0 %v867
    %869 = vmatprep.subr.mxu0 0.0
    %v870 = vand.u32 %v37, 4294901760
    %871 = vmatpush1.msra.mxu0 %v870
    %872 = vmatprep.subr.mxu0 0.0
    %v873 = vand.u32 %v38, 4294901760
    %874 = vmatpush1.msra.mxu0 %v873
    %875 = vmatprep.subr.mxu0 0.0
    %v876 = vand.u32 %v39, 4294901760
    %877 = vmatpush1.msra.mxu0 %v876
    %878 = vmatprep.subr.mxu0 0.0
    %v879 = vand.u32 %v40, 4294901760
    %880 = vmatpush1.msra.mxu0 %v879
    %881 = vmatprep.subr.mxu0 0.0
    %v882 = vand.u32 %v41, 4294901760
    %883 = vmatpush1.msra.mxu0 %v882
    %884 = vmatprep.subr.mxu0 0.0
    %v885 = vand.u32 %v42, 4294901760
    %886 = vmatpush1.msra.mxu0 %v885
    %887 = vmatprep.subr.mxu0 0.0
    %v888 = vand.u32 %v43, 4294901760
    %889 = vmatpush1.msra.mxu0 %v888
    %890 = vmatprep.subr.mxu0 0.0
    %v891 = vand.u32 %v44, 4294901760
    %892 = vmatpush1.msra.mxu0 %v891
    %893 = vmatprep.subr.mxu0 0.0
    %v894 = vand.u32 %v45, 4294901760
    %895 = vmatpush1.msra.mxu0 %v894
    %896 = vmatprep.subr.mxu0 0.0
    %v897 = vand.u32 %v46, 4294901760
    %898 = vmatpush1.msra.mxu0 %v897
    %899 = vmatprep.subr.mxu0 0.0
    %v900 = vand.u32 %v47, 4294901760
    %901 = vmatpush1.msra.mxu0 %v900
    %v902 = vand.u32 %v15, 4294901760
    %903 = vmatprep.mubr.f32.mxu0 %v902
    %v904 = vand.u32 %v14, 4294901760
    %905 = vmatmul.mubr.f32.gmra.mrb[0].mxu0 %v904
    %v906 = vpop.f32.mrb[0].mxu0
    %v907 = vadd.f32 %v803, %v906
    %v908 = vpop.f32.mrb[0].mxu0
    %909 = vdwg.mxu0
    %v910 = vrsqrt.pop %v907
    %v911 = vmul.f32 %v907, %v910
    %vm912 = vcmp.eq.f32.partialorder %v907, inf
    %v913 = vsel %vm912, %v907, %v911
    %vm914 = vcmp.eq.f32.partialorder %v907, 0.0
    %v915 = vand.u32 %v907, 2147483648
    %v916 = vsel %vm914, %v915, %v913
    %vm917 = vcmask 523264
    %918 = vst.msk [vmem:[#allocation2] sm:$0xff] %vm917, %v916
    // Predicated region
    $region10: #{tpu_custom_call.1} parent=1 // pred_check
      _
    $region11: #{tpu_custom_call.1} parent=1 // pred_check_branch
      %920 = sbr.rel (0) target = $region13
    $region12: #{tpu_custom_call.1} parent=1 // pred_region
      %s922 = ssub.s32 128, 128
      %923 = vsyncadd [#allocation3], %s922
      %s925 = sshll.u32 [#allocation2], 4
      %s926 = int_to_ptr.vmem [resolvable:$true] %s925
      %928 = dma.vmem_to_hbm [thread:$0]  %s926, 128, %s2, [#allocation3]
    $region13: #{tpu_custom_call.1} parent=1 // pred_fallthru
      _
    // Predicated region
    $region14: #{tpu_custom_call.1} parent=1 // pred_check
      _
    $region15: #{tpu_custom_call.1} parent=1 // pred_check_branch
      %930 = sbr.rel (0) target = $region17
    $region16: #{tpu_custom_call.1} parent=1 // pred_region
      %931 = dma.done [#allocation3], 128
    $region17: #{tpu_custom_call.1} parent=1 // pred_fallthru
      _
    %932 = vsyncpa [#allocation3], 1

</llo_original>
